<compile_context>
chip_gen: v5e
topology: v5e:2x2
jax: 0.10.0
libtpu: 0.0.40
codegen_flags: <defaults>
</compile_context>

<pallas_src>
import jax
import jax.numpy as jnp
from jax.experimental import pallas as pl
from jax.experimental.pallas import tpu as pltpu


def _round_up(n: int, m: int) -> int:
    return ((n + m - 1) // m) * m


def _dual_mlp_kernel(x_ref, w1t_ref, w2t_ref, o_ref, h_ref):
    # x_ref:   (tm, D)   bf16 batch tile (branch dim squeezed away)
    # w1t_ref: (D, H)    bf16  W1.T for this branch (VMEM-resident per branch)
    # w2t_ref: (H, D)    bf16  W2.T for this branch
    # o_ref:   (tm, D)   output tile (input dtype, e.g. f32)
    # h_ref:   (tm, H)   f32 VMEM scratch for the hidden activation
    h_ref[...] = jnp.maximum(
        jnp.dot(x_ref[...], w1t_ref[...], preferred_element_type=jnp.float32),
        0.0,
    )
    o_ref[...] = jnp.dot(
        h_ref[...].astype(w2t_ref.dtype),  # bf16 operand, f32 accumulate
        w2t_ref[...],
        preferred_element_type=jnp.float32,
    ).astype(o_ref.dtype)


def _vmem_limit_bytes(tm: int, D: int, H: int, cbytes: int, obytes: int) -> int:
    x_tiles = 2 * tm * D * cbytes          # input tile, double-buffered
    o_tiles = 2 * tm * D * obytes          # output tile, double-buffered
    weights = 2 * 2 * D * H * cbytes       # W1.T + W2.T, double-buffered
    h_scr = tm * H * 4                     # f32 hidden scratch
    est = x_tiles + o_tiles + weights + h_scr
    # 2x headroom for compiler temporaries; clamp to [32 MiB default scoped
    # limit, 64 MiB v7x physical VMEM].
    return int(min(max(2 * est, 32 * 1024 * 1024), 64 * 1024 * 1024))


def dual_mlp(xy, w1t, w2t, *, tm: int = 256, compute_dtype=jnp.bfloat16):
    """out[b] = relu(xy[b] @ w1t[b]) @ w2t[b] for b in {0, 1}.

    xy: (2, B, D), w1t: (2, D, H), w2t: (2, H, D).
    Runs both branches in a single pallas_call, tiled over the batch.
    tm=256 targets v6e/v7x MXU width; 128 is a reasonable choice on v5e.
    """
    two, B, D = xy.shape
    assert two == 2 and w1t.shape[0] == 2 and w2t.shape[0] == 2
    H = w1t.shape[2]
    assert w1t.shape == (2, D, H) and w2t.shape == (2, H, D)

    out_dtype = xy.dtype

    # Clamp the tile to the (16-aligned) batch and pad the batch to a multiple
    # of the tile instead of requiring B % tm == 0.
    tm = min(tm, _round_up(B, 16))
    Bp = _round_up(B, tm)
    if Bp != B:
        xy = jnp.pad(xy, ((0, 0), (0, Bp - B), (0, 0)))

    # bf16 operands at the pallas_call boundary (f32 accumulation in-kernel).
    xy_c = xy.astype(compute_dtype)
    w1t_c = w1t.astype(compute_dtype)
    w2t_c = w2t.astype(compute_dtype)

    cbytes = jnp.dtype(compute_dtype).itemsize
    obytes = jnp.dtype(out_dtype).itemsize

    # TODO(synk): if 4*D*H*cbytes ever exceeds ~48 MiB (huge shape*hidden on
    # v7x), tile the hidden dim H with a K-loop + f32 accumulator instead of
    # keeping both weight matrices fully resident.

    out = pl.pallas_call(
        _dual_mlp_kernel,
        out_shape=jax.ShapeDtypeStruct((2, Bp, D), out_dtype),
        grid_spec=pltpu.PrefetchScalarGridSpec(
            num_scalar_prefetch=0,
            grid=(2, Bp // tm),  # (branch, batch-tile); batch iterates fastest
            in_specs=[
                # activations: per-branch, per-batch-tile, lane-dense in D
                pl.BlockSpec((None, tm, D), lambda b, i: (b, i, 0)),
                # weights: constant across batch tiles -> only re-DMA'd when
                # the branch index changes (2 fetches per weight, total)
                pl.BlockSpec((None, D, H), lambda b, i: (b, 0, 0)),
                pl.BlockSpec((None, H, D), lambda b, i: (b, 0, 0)),
            ],
            out_specs=pl.BlockSpec((None, tm, D), lambda b, i: (b, i, 0)),
            scratch_shapes=[pltpu.VMEM((tm, H), jnp.float32)],
        ),
        compiler_params=pltpu.CompilerParams(
            dimension_semantics=("parallel", "parallel"),
            vmem_limit_bytes=_vmem_limit_bytes(tm, D, H, cbytes, obytes),
        ),
    )(xy_c, w1t_c, w2t_c)

    return out[:, :B, :]


class NonLinearModelPallas:
    """JAX/Pallas port of NonLinearModel (ReLU activation, eye_ init)."""

    def __init__(self, shape: int, hidden: int = 1024, *,
                 param_dtype=jnp.bfloat16, tm: int = 256):
        # nn.init.eye_(W) with W of shape (out, in) -> identity in the top-left.
        # We store the TRANSPOSED weights (what the kernel consumes), stacked
        # along a leading branch axis: index 0 = Wxy, index 1 = Wyx.
        eye_1t = jnp.eye(shape, hidden, dtype=param_dtype)   # (D, H) == W1.T
        eye_2t = jnp.eye(hidden, shape, dtype=param_dtype)   # (H, D) == W2.T
        self.w1t = jnp.stack([eye_1t, eye_1t])                # (2, D, H)
        self.w2t = jnp.stack([eye_2t, eye_2t])                # (2, H, D)
        self._compute_dtype = param_dtype
        self._tm = tm
        # jit fuses the stack / cast / pad / slice around the single kernel.
        self._run = jax.jit(
            lambda xy, w1t, w2t: dual_mlp(
                xy, w1t, w2t, tm=self._tm, compute_dtype=self._compute_dtype
            )
        )

    def forward(self, x, y):
        out = self._run(jnp.stack([x, y]), self.w1t, self.w2t)
        return out[0], out[1]

    def cycle(self, x, y):
        # X -> Y -> X and Y -> X -> Y:  (Wyx(Wxy(x)), Wxy(Wyx(y)))
        cx, cy = self.forward(x, y)                      # Wxy(x), Wyx(y)
        out = self._run(jnp.stack([cx, cy]),
                        self.w1t[::-1], self.w2t[::-1])  # swap branch weights
        return out[0], out[1]


if __name__ == "__main__":
    # Small shapes consistent with the module: embeddings of dim `shape`.
    B, D, H = 16, 128, 256

    key = jax.random.PRNGKey(0)
    kx, ky = jax.random.split(key)
    x = jax.random.normal(kx, (B, D), dtype=jnp.float32)
    y = jax.random.normal(ky, (B, D), dtype=jnp.float32)

    model = NonLinearModelPallas(shape=D, hidden=H)

    out_x, out_y = model.forward(x, y)
    jax.block_until_ready((out_x, out_y))

    # Pure-JAX fp32 reference for the forward semantics (kernel uses bf16
    # operands with f32 accumulation -> relaxed tolerance).
    w1t_ref = jnp.eye(D, H, dtype=jnp.float32)
    w2t_ref = jnp.eye(H, D, dtype=jnp.float32)

    def ref_mlp(v):
        return jnp.maximum(v @ w1t_ref, 0.0) @ w2t_ref

    ref_x, ref_y = ref_mlp(x), ref_mlp(y)

    assert out_x.shape == (B, D) and out_y.shape == (B, D)
    assert jnp.allclose(out_x, ref_x, atol=2e-2, rtol=2e-2)
    assert jnp.allclose(out_y, ref_y, atol=2e-2, rtol=2e-2)

    # Exercise cycle() as well (same fused kernel with swapped branch weights).
    cyc_x, cyc_y = model.cycle(x, y)
    jax.block_until_ready((cyc_x, cyc_y))
    assert cyc_x.shape == (B, D) and cyc_y.shape == (B, D)

    print("KERNEL_OK")
</pallas_src>

<mosaic_0001>
module attributes {stable_mosaic.version = 11 : i64} {
  func.func @_dual_mlp_kernel(%arg0: i32, %arg1: i32, %arg2: memref<1x16x128xbf16, #tpu.memory_space<vmem>>, %arg3: memref<1x128x256xbf16, #tpu.memory_space<vmem>>, %arg4: memref<1x256x128xbf16, #tpu.memory_space<vmem>>, %arg5: memref<1x16x128xf32, #tpu.memory_space<vmem>>, %arg6: memref<16x256xf32, #tpu.memory_space<vmem>>) attributes {dimension_semantics = [#tpu.dimension_semantics<parallel>, #tpu.dimension_semantics<parallel>], iteration_bounds = array<i64: 2, 1>, scalar_prefetch = 0 : i64, scratch_operands = 1 : i64, tpu.core_type = #tpu.core_type<tc>, window_params = [{transform_indices = @transform_0, window_bounds = array<i64: 1, 16, 128>}, {transform_indices = @transform_1, window_bounds = array<i64: 1, 128, 256>}, {transform_indices = @transform_2, window_bounds = array<i64: 1, 256, 128>}, {transform_indices = @transform_3, window_bounds = array<i64: 1, 16, 128>}]} {
    %c0 = arith.constant 0 : index
    %c0_0 = arith.constant 0 : index
    %c0_1 = arith.constant 0 : index
    %0 = vector.load %arg2[%c0, %c0_0, %c0_1] : memref<1x16x128xbf16, #tpu.memory_space<vmem>>, vector<1x16x128xbf16>
    %1 = vector.shape_cast %0 : vector<1x16x128xbf16> to vector<16x128xbf16>
    %c0_2 = arith.constant 0 : index
    %c0_3 = arith.constant 0 : index
    %c0_4 = arith.constant 0 : index
    %2 = vector.load %arg3[%c0_2, %c0_3, %c0_4] : memref<1x128x256xbf16, #tpu.memory_space<vmem>>, vector<1x128x256xbf16>
    %3 = vector.shape_cast %2 : vector<1x128x256xbf16> to vector<128x256xbf16>
    %cst = arith.constant dense<0.000000e+00> : vector<16x256xf32>
    %4 = tpu.matmul %1, %3, %cst {dimension_numbers = #tpu.dot_dimension_numbers<[1], [0], [0], [1], [0, 0, 1, 1], [], []>} : vector<16x128xbf16>, vector<128x256xbf16>, vector<16x256xf32> -> vector<16x256xf32>
    %cst_5 = arith.constant 0.000000e+00 : f32
    %5 = vector.broadcast %cst_5 : f32 to vector<16x256xf32>
    %6 = arith.maximumf %4, %5 : vector<16x256xf32>
    %c0_6 = arith.constant 0 : index
    %c0_7 = arith.constant 0 : index
    %7 = vector.load %arg6[%c0_6, %c0_7] : memref<16x256xf32, #tpu.memory_space<vmem>>, vector<16x256xf32>
    tpu.vector_store %arg6[%c0_6, %c0_7], %6 {strides = array<i32>} : memref<16x256xf32, #tpu.memory_space<vmem>>, vector<16x256xf32>,
    %c0_8 = arith.constant 0 : index
    %c0_9 = arith.constant 0 : index
    %8 = vector.load %arg6[%c0_8, %c0_9] : memref<16x256xf32, #tpu.memory_space<vmem>>, vector<16x256xf32>
    %9 = arith.truncf %8 : vector<16x256xf32> to vector<16x256xbf16>
    %c0_10 = arith.constant 0 : index
    %c0_11 = arith.constant 0 : index
    %c0_12 = arith.constant 0 : index
    %10 = vector.load %arg4[%c0_10, %c0_11, %c0_12] : memref<1x256x128xbf16, #tpu.memory_space<vmem>>, vector<1x256x128xbf16>
    %11 = vector.shape_cast %10 : vector<1x256x128xbf16> to vector<256x128xbf16>
    %cst_13 = arith.constant dense<0.000000e+00> : vector<16x128xf32>
    %12 = tpu.matmul %9, %11, %cst_13 {dimension_numbers = #tpu.dot_dimension_numbers<[1], [0], [0], [1], [0, 0, 1, 1], [], []>} : vector<16x256xbf16>, vector<256x128xbf16>, vector<16x128xf32> -> vector<16x128xf32>
    %c0_14 = arith.constant 0 : index
    %c0_15 = arith.constant 0 : index
    %c0_16 = arith.constant 0 : index
    %13 = vector.load %arg5[%c0_14, %c0_15, %c0_16] : memref<1x16x128xf32, #tpu.memory_space<vmem>>, vector<1x16x128xf32>
    %14 = vector.shape_cast %13 : vector<1x16x128xf32> to vector<16x128xf32>
    %15 = vector.shape_cast %12 : vector<16x128xf32> to vector<1x16x128xf32>
    tpu.vector_store %arg5[%c0_14, %c0_15, %c0_16], %15 {strides = array<i32>} : memref<1x16x128xf32, #tpu.memory_space<vmem>>, vector<1x16x128xf32>,
    return
  }
  func.func @transform_0(%arg0: i32, %arg1: i32) -> (i32, i32, i32) {
    %c0_i32 = arith.constant 0 : i32
    %c0_i32_0 = arith.constant 0 : i32
    return %arg0, %arg1, %c0_i32 : i32, i32, i32
  }
  func.func @transform_1(%arg0: i32, %arg1: i32) -> (i32, i32, i32) {
    %c0_i32 = arith.constant 0 : i32
    %c0_i32_0 = arith.constant 0 : i32
    %c0_i32_1 = arith.constant 0 : i32
    return %arg0, %c0_i32, %c0_i32_0 : i32, i32, i32
  }
  func.func @transform_2(%arg0: i32, %arg1: i32) -> (i32, i32, i32) {
    %c0_i32 = arith.constant 0 : i32
    %c0_i32_0 = arith.constant 0 : i32
    %c0_i32_1 = arith.constant 0 : i32
    return %arg0, %c0_i32, %c0_i32_0 : i32, i32, i32
  }
  func.func @transform_3(%arg0: i32, %arg1: i32) -> (i32, i32, i32) {
    %c0_i32 = arith.constant 0 : i32
    %c0_i32_0 = arith.constant 0 : i32
    return %arg0, %arg1, %c0_i32 : i32, i32, i32
  }
}

</mosaic_0001>

<llo_original>
// kernel: _lambda_.1
$region0: #{_lambda_.1}
  #allocation0 [shape = 'u32[]', space=smem, size = 0x4, offset = 0x4, fixed_abs, tag = 'smem constant byte address 0x4 - core index']
  #allocation1 [shape = 'u32[72,128]{1,0:T(1,128)}', space=vmem, size = 0x9000, scoped, tag = 'internal scratch']
  #allocation2 [shape = 'f32[16,256]{1,0:T(8,128)}', space=vmem, size = 0x4000, scoped, tag = 'scratch operand']
  %s0 = inlined_call_operand.vmem [shape: bf16[2,16,128], index: 0, kind: input, shape index: {}]
  %s1 = inlined_call_operand.hbm [shape: bf16[2,128,256], index: 1, kind: input, shape index: {}]
  %s2 = inlined_call_operand.hbm [shape: bf16[2,256,128], index: 2, kind: input, shape index: {}]
  %s3 = inlined_call_operand.hbm [shape: f32[2,16,128], index: 3, kind: output, shape index: {}]
  %s4 = sld [smem:[#allocation0]]
  $region53: #{_lambda_.1} parent=0
    _
  %s6 = ssub.s32 1, %s4
  %s7 = scalar_select 0, %s6, %s4
  $region1: #{_lambda_.1} parent=0
    #allocation3 [shape = 'u8[131072]{0}', space=vmem, size = 0x20000, scoped, tag = 'input window, operand 1']
    #allocation4 [shape = 's32[2]{0}', space=sflag, size = 0x8, scoped, tag = 'scoped memory for _lambda_.1']
    #allocation5 [shape = 's32[2]{0}', space=sflag, size = 0x8, scoped, tag = 'scoped memory for _lambda_.1']
    #allocation6 [shape = 'u8[131072]{0}', space=vmem, size = 0x20000, scoped, tag = 'input window, operand 2']
    #allocation7 [shape = 's32[2]{0}', space=sflag, size = 0x8, scoped, tag = 'scoped memory for _lambda_.1']
    #allocation8 [shape = 'u8[16384]{0}', space=vmem, size = 0x4000, scoped, tag = 'output window, operand 0']
    %8 = vsyncpa [#allocation4], 0
    %s9 = scalar_lea.sflag [#allocation4], 1
    %10 = vsyncpa %s9, 0
    %11 = vsyncpa [#allocation7], 0
    %s12 = scalar_lea.sflag [#allocation7], 1
    %13 = vsyncpa %s12, 0
    %14 = vsyncpa [#allocation5], 0
    %s15 = scalar_lea.sflag [#allocation5], 1
    %16 = vsyncpa %s15, 0
    loop: start=0, step=1, limit=4
    $region2: #{_lambda_.1} parent=1 // loop_pre_header
      _
    $region3: #{_lambda_.1} parent=1 // loop_header
      %s18 = sphi 0, %s22
      %p19 = scmp.ge.s32.totalorder %s18, 4
      %s25 = sphi 0, %s37
      %s26 = sphi 0, %s33
      %s27 = sphi 0, %s25
      %s28 = sphi 0, %s26
      %s29 = sphi 0, %s27
      %s30 = sphi 0, %s28
      %s42 = sphi 0, %s44
      %s45 = sphi 0, %s42
      %s46 = sphi 0, %s45
      %s62 = sphi 0, %s46
      %s68 = sphi 0, %s70
      %s71 = sphi 0, %s68
      %s72 = sphi 0, %s71
      %s88 = sphi 0, %s72
      %s94 = sphi 0, %s96
      %s97 = sphi 0, %s94
      %s98 = sphi 0, %s97
      %s114 = sphi 0, %s98
      %s122 = sphi 0, %s124
      %s125 = sphi 0, %s122
      %s126 = sphi 0, %s125
      %s142 = sphi 0, %s126
    $region4: #{_lambda_.1} parent=1 // loop_header_branch
      %21 = sbr.rel (%p19) target = $region8
    $region5: #{_lambda_.1} parent=1 // loop_body
      %s23 = ssub.s32 %s18, 1
      %s24 = ssub.s32 %s18, 2
      %s31 = sadd.s32 1, %s26
      %p32 = scmp.ge.s32.totalorder %s31, 1
      %s33 = scalar_select %p32, 0, %s31
      %s34 = sadd.s32 1, %s25
      %s35 = scalar_select %p32, %s34, %s25
      %p36 = scmp.ge.s32.totalorder %s35, 2
      %s37 = scalar_select %p36, 0, %s35
      %s38 = ssub.s32 %s25, %s37
      %s39 = ssub.s32 %s26, %s33
      %s40 = sor.u32 %s38, %s39
      %p41 = scmp.eq.s32.totalorder %s40, 0
      %s43 = sadd.s32 %s42, 1
      %s44 = scalar_select %p41, %s42, %s43
      %p47 = pneg %p41
      %p48 = scmp.eq.s32.totalorder %s18, 1
      %p49 = por %p47, %p48
      %p50 = scmp.ne.s32.totalorder %s42, %s45
      %p51 = scmp.eq.s32.totalorder %s18, 0
      %p52 = por %p50, %p51
      %p53 = scmp.ne.s32.totalorder %s42, %s45
      %p54 = scmp.eq.s32.totalorder %s23, 1
      %p55 = por %p53, %p54
      %p56 = scmp.ne.s32.totalorder %s45, %s46
      %p57 = scmp.eq.s32.totalorder %s23, 0
      %p58 = por %p56, %p57
      %p59 = scmp.ne.s32.totalorder %s45, %s46
      %p60 = scmp.eq.s32.totalorder %s24, 1
      %p61 = por %p59, %p60
      %p63 = scmp.ne.s32.totalorder %s46, %s62
      %p64 = scmp.eq.s32.totalorder %s24, 0
      %p65 = por %p63, %p64
      %s66 = ssub.s32 %s25, %s37
      %p67 = scmp.eq.s32.totalorder %s66, 0
      %s69 = sadd.s32 %s68, 1
      %s70 = scalar_select %p67, %s68, %s69
      %p73 = pneg %p67
      %p74 = scmp.eq.s32.totalorder %s18, 1
      %p75 = por %p73, %p74
      %p76 = scmp.ne.s32.totalorder %s68, %s71
      %p77 = scmp.eq.s32.totalorder %s18, 0
      %p78 = por %p76, %p77
      %p79 = scmp.ne.s32.totalorder %s68, %s71
      %p80 = scmp.eq.s32.totalorder %s23, 1
      %p81 = por %p79, %p80
      %p82 = scmp.ne.s32.totalorder %s71, %s72
      %p83 = scmp.eq.s32.totalorder %s23, 0
      %p84 = por %p82, %p83
      %p85 = scmp.ne.s32.totalorder %s71, %s72
      %p86 = scmp.eq.s32.totalorder %s24, 1
      %p87 = por %p85, %p86
      %p89 = scmp.ne.s32.totalorder %s72, %s88
      %p90 = scmp.eq.s32.totalorder %s24, 0
      %p91 = por %p89, %p90
      %s92 = ssub.s32 %s25, %s37
      %p93 = scmp.eq.s32.totalorder %s92, 0
      %s95 = sadd.s32 %s94, 1
      %s96 = scalar_select %p93, %s94, %s95
      %p99 = pneg %p93
      %p100 = scmp.eq.s32.totalorder %s18, 1
      %p101 = por %p99, %p100
      %p102 = scmp.ne.s32.totalorder %s94, %s97
      %p103 = scmp.eq.s32.totalorder %s18, 0
      %p104 = por %p102, %p103
      %p105 = scmp.ne.s32.totalorder %s94, %s97
      %p106 = scmp.eq.s32.totalorder %s23, 1
      %p107 = por %p105, %p106
      %p108 = scmp.ne.s32.totalorder %s97, %s98
      %p109 = scmp.eq.s32.totalorder %s23, 0
      %p110 = por %p108, %p109
      %p111 = scmp.ne.s32.totalorder %s97, %s98
      %p112 = scmp.eq.s32.totalorder %s24, 1
      %p113 = por %p111, %p112
      %p115 = scmp.ne.s32.totalorder %s98, %s114
      %p116 = scmp.eq.s32.totalorder %s24, 0
      %p117 = por %p115, %p116
      %s118 = ssub.s32 %s25, %s37
      %s119 = ssub.s32 %s26, %s33
      %s120 = sor.u32 %s118, %s119
      %p121 = scmp.eq.s32.totalorder %s120, 0
      %s123 = sadd.s32 %s122, 1
      %s124 = scalar_select %p121, %s122, %s123
      %p127 = pneg %p121
      %p128 = scmp.eq.s32.totalorder %s18, 1
      %p129 = por %p127, %p128
      %p130 = scmp.ne.s32.totalorder %s122, %s125
      %p131 = scmp.eq.s32.totalorder %s18, 0
      %p132 = por %p130, %p131
      %p133 = scmp.ne.s32.totalorder %s122, %s125
      %p134 = scmp.eq.s32.totalorder %s23, 1
      %p135 = por %p133, %p134
      %p136 = scmp.ne.s32.totalorder %s125, %s126
      %p137 = scmp.eq.s32.totalorder %s23, 0
      %p138 = por %p136, %p137
      %p139 = scmp.ne.s32.totalorder %s125, %s126
      %p140 = scmp.eq.s32.totalorder %s24, 1
      %p141 = por %p139, %p140
      %p143 = scmp.ne.s32.totalorder %s126, %s142
      %p144 = scmp.eq.s32.totalorder %s24, 0
      %p145 = por %p143, %p144
      %p146 = scmp.le.s32.totalorder 1, %s18
      %p147 = scmp.lt.s32.totalorder %s18, 3
      %p148 = pnand %p146, %p147
      %p149 = pneg %p148
      // Predicated region
      $region9: #{_lambda_.1} parent=5 // pred_check
        _
      $region10: #{_lambda_.1} parent=5 // pred_check_branch
        %151 = sbr.rel (%p148) target = $region12
      $region11: #{_lambda_.1} parent=5 // pred_region
        %s152 = ssub.s32 %s18, 1
      $region12: #{_lambda_.1} parent=5 // pred_fallthru
        _
      %p153 = scmp.lt.s32.totalorder %s18, 2
      // Predicated region
      $region13: #{_lambda_.1} parent=5 // pred_check
        %p154 = pneg %p153
      $region14: #{_lambda_.1} parent=5 // pred_check_branch
        %156 = sbr.rel (%p154) target = $region16
      $region15: #{_lambda_.1} parent=5 // pred_region
        // Predicated region
        $region17: #{_lambda_.1} parent=15 // pred_check
          %p157 = pneg %p52
        $region18: #{_lambda_.1} parent=15 // pred_check_branch
          %159 = sbr.rel (%p157) target = $region20
        $region19: #{_lambda_.1} parent=15 // pred_region
          %s160 = smul.u32 2, %s26
          %p161 = scmp.lt.s32.totalorder %s25, 1
          %s162 = scalar_select %p161, %s25, 1
          %p163 = scmp.lt.s32.totalorder %s160, 1
          %s164 = scalar_select %p163, %s160, 1
          %s165 = smul.addr %s162, 2
          %s166 = sadd.s32 %s164, %s165
          %s167 = smul.addr %s166, 4
          %s168 = scalar_lea.vmem %s0, %s167
          %s169 = smul.u32 2, %s26
        $region20: #{_lambda_.1} parent=15 // pred_fallthru
          _
        // Predicated region
        $region21: #{_lambda_.1} parent=15 // pred_check
          %p170 = pneg %p78
        $region22: #{_lambda_.1} parent=15 // pred_check_branch
          %172 = sbr.rel (%p170) target = $region24
        $region23: #{_lambda_.1} parent=15 // pred_region
          %s173 = sand.u32 %s68, 1
          %s174 = scalar_lea.sflag [#allocation4], %s173
          %s175 = sand.u32 %s68, 1
          %s176 = smul.addr %s175, 128
          %s177 = scalar_lea.vmem [#allocation3], %s176
          %179 = vsyncadd %s174, 0
          %s180 = smul.addr %s25, 32
          %s181 = smul.addr %s180, 4
          %s182 = scalar_lea.hbm %s1, %s181
          %s183 = sshll.u32 %s182, 4
          %s184 = int_to_ptr.hbm [resolvable:$true] %s183
          %s185 = sshll.u32 %s177, 4
          %s186 = int_to_ptr.vmem [resolvable:$true] %s185
          %191 = dma.hbm_to_vmem [thread:$0]  %s184, 2048, %s186, %s174, 128, 128, 8
        $region24: #{_lambda_.1} parent=15 // pred_fallthru
          _
        // Predicated region
        $region25: #{_lambda_.1} parent=15 // pred_check
          %p192 = pneg %p104
        $region26: #{_lambda_.1} parent=15 // pred_check_branch
          %194 = sbr.rel (%p192) target = $region28
        $region27: #{_lambda_.1} parent=15 // pred_region
          %s195 = sand.u32 %s94, 1
          %s196 = scalar_lea.sflag [#allocation7], %s195
          %s197 = sand.u32 %s94, 1
          %s198 = smul.addr %s197, 128
          %s199 = scalar_lea.vmem [#allocation6], %s198
          %201 = vsyncadd %s196, 0
          %s202 = smul.addr %s25, 32
          %s203 = smul.addr %s202, 4
          %s204 = scalar_lea.hbm %s2, %s203
          %s205 = sshll.u32 %s204, 4
          %s206 = int_to_ptr.hbm [resolvable:$true] %s205
          %s207 = sshll.u32 %s199, 4
          %s208 = int_to_ptr.vmem [resolvable:$true] %s207
          %213 = dma.hbm_to_vmem [thread:$0]  %s206, 2048, %s208, %s196, 64, 64, 4
        $region28: #{_lambda_.1} parent=15 // pred_fallthru
          _
      $region16: #{_lambda_.1} parent=5 // pred_fallthru
        _
      %p214 = scmp.le.s32.totalorder 1, %s18
      %p215 = scmp.lt.s32.totalorder %s18, 3
      %p216 = pnand %p214, %p215
      %p217 = pneg %p216
      // Predicated region
      $region29: #{_lambda_.1} parent=5 // pred_check
        _
      $region30: #{_lambda_.1} parent=5 // pred_check_branch
        %219 = sbr.rel (%p216) target = $region32
      $region31: #{_lambda_.1} parent=5 // pred_region
        %s220 = ssub.s32 %s18, 1
        %s221 = sand.u32 %s71, 1
        %s222 = scalar_lea.sflag [#allocation4], %s221
        %s223 = sand.u32 %s71, 1
        %s224 = smul.addr %s223, 128
        %s225 = scalar_lea.vmem [#allocation3], %s224
        // Predicated region
        $region33: #{_lambda_.1} parent=31 // pred_check
          %p226 = pneg %p84
        $region34: #{_lambda_.1} parent=31 // pred_check_branch
          %228 = sbr.rel (%p226) target = $region36
        $region35: #{_lambda_.1} parent=31 // pred_region
          %230 = dma.done %s222, 2048
        $region36: #{_lambda_.1} parent=31 // pred_fallthru
          _
        %s231 = sand.u32 %s97, 1
        %s232 = scalar_lea.sflag [#allocation7], %s231
        %s233 = sand.u32 %s97, 1
        %s234 = smul.addr %s233, 128
        %s235 = scalar_lea.vmem [#allocation6], %s234
        // Predicated region
        $region37: #{_lambda_.1} parent=31 // pred_check
          %p236 = pneg %p110
        $region38: #{_lambda_.1} parent=31 // pred_check_branch
          %238 = sbr.rel (%p236) target = $region40
        $region39: #{_lambda_.1} parent=31 // pred_region
          %240 = dma.done %s232, 2048
        $region40: #{_lambda_.1} parent=31 // pred_fallthru
          _
        %s241 = smul.u32 2, %s28
        %p242 = scmp.lt.s32.totalorder %s27, 1
        %s243 = scalar_select %p242, %s27, 1
        %p244 = scmp.lt.s32.totalorder %s241, 1
        %s245 = scalar_select %p244, %s241, 1
        %s246 = smul.addr %s243, 2
        %s247 = sadd.s32 %s245, %s246
        %s248 = smul.addr %s247, 4
        %s249 = scalar_lea.vmem %s0, %s248
        %p250 = pneg %p58
        %p251 = pneg %p55
        %s252 = sand.u32 %s71, 1
        %s253 = scalar_lea.sflag [#allocation4], %s252
        %s254 = sand.u32 %s71, 1
        %s255 = smul.addr %s254, 128
        %s256 = scalar_lea.vmem [#allocation3], %s255
        %p257 = pneg %p84
        %p258 = pneg %p81
        %s259 = sand.u32 %s97, 1
        %s260 = scalar_lea.sflag [#allocation7], %s259
        %s261 = sand.u32 %s97, 1
        %s262 = smul.addr %s261, 128
        %s263 = scalar_lea.vmem [#allocation6], %s262
        %p264 = pneg %p110
        %p265 = pneg %p107
        %p266 = pneg %p138
        %p267 = pneg %p135
        %s268 = sand.u32 %s125, 1
        %s269 = scalar_lea.sflag [#allocation5], %s268
        %s270 = sand.u32 %s125, 1
        %s271 = smul.addr %s270, 16
        %s272 = scalar_lea.vmem [#allocation8], %s271
        %s273 = smul.u32 2, %s28
        %p274 = scmp.lt.s32.totalorder %s27, 1
        %s275 = scalar_select %p274, %s27, 1
        %p276 = scmp.lt.s32.totalorder %s273, 1
        %s277 = scalar_select %p276, %s273, 1
        %s278 = smul.addr %s275, 2
        %s279 = sadd.s32 %s277, %s278
        %s280 = smul.addr %s279, 4
        %s281 = scalar_lea.vmem %s0, %s280
        %s282 = smul.u32 2, %s28
        %s283 = smul.u32 2, %s28
        %v284 = vld [vmem:[%s281] sm:$0xf]
        %v285 = vld [vmem:[%s281 + $0x4] sm:$0xf]
        %v286 = vld [vmem:[%s225] sm:$0xff]
        %v287 = vld [vmem:[%s225 + $0x8] sm:$0xff]
        %v288 = vld [vmem:[%s225 + $0x10] sm:$0xff]
        %v289 = vld [vmem:[%s225 + $0x18] sm:$0xff]
        %v290 = vld [vmem:[%s225 + $0x20] sm:$0xff]
        %v291 = vld [vmem:[%s225 + $0x28] sm:$0xff]
        %v292 = vld [vmem:[%s225 + $0x30] sm:$0xff]
        %v293 = vld [vmem:[%s225 + $0x38] sm:$0xff]
        %v294 = vld [vmem:[%s225 + $0x40] sm:$0xff]
        %v295 = vld [vmem:[%s225 + $0x48] sm:$0xff]
        %v296 = vld [vmem:[%s225 + $0x50] sm:$0xff]
        %v297 = vld [vmem:[%s225 + $0x58] sm:$0xff]
        %v298 = vld [vmem:[%s225 + $0x60] sm:$0xff]
        %v299 = vld [vmem:[%s225 + $0x68] sm:$0xff]
        %v300 = vld [vmem:[%s225 + $0x70] sm:$0xff]
        %v301 = vld [vmem:[%s225 + $0x78] sm:$0xff]
        %v304 = vunpack.c.l.b16 %v284
        %v305 = vunpack.c.l.b16 %v285
        %v306 = vpack.c.b16 %v305, %v304
        %v324 = vunpack.c.l.b16 %v286
        %v325 = vunpack.c.h.b16 %v286
        %v326 = vunpack.c.l.b16 %v287
        %v327 = vunpack.c.h.b16 %v287
        %v328 = vunpack.c.l.b16 %v288
        %v329 = vunpack.c.h.b16 %v288
        %v330 = vunpack.c.l.b16 %v289
        %v331 = vunpack.c.h.b16 %v289
        %v332 = vunpack.c.l.b16 %v290
        %v333 = vunpack.c.h.b16 %v290
        %v334 = vunpack.c.l.b16 %v291
        %v335 = vunpack.c.h.b16 %v291
        %v336 = vunpack.c.l.b16 %v292
        %v337 = vunpack.c.h.b16 %v292
        %v338 = vunpack.c.l.b16 %v293
        %v339 = vunpack.c.h.b16 %v293
        %v340 = vunpack.c.l.b16 %v294
        %v341 = vunpack.c.h.b16 %v294
        %v342 = vunpack.c.l.b16 %v295
        %v343 = vunpack.c.h.b16 %v295
        %v344 = vunpack.c.l.b16 %v296
        %v345 = vunpack.c.h.b16 %v296
        %v346 = vunpack.c.l.b16 %v297
        %v347 = vunpack.c.h.b16 %v297
        %v348 = vunpack.c.l.b16 %v298
        %v349 = vunpack.c.h.b16 %v298
        %v350 = vunpack.c.l.b16 %v299
        %v351 = vunpack.c.h.b16 %v299
        %v352 = vunpack.c.l.b16 %v300
        %v353 = vunpack.c.h.b16 %v300
        %v354 = vunpack.c.l.b16 %v301
        %v355 = vunpack.c.h.b16 %v301
        %v356 = vpack.c.b16 %v326, %v324
        %v357 = vpack.c.b16 %v327, %v325
        %v358 = vpack.c.b16 %v330, %v328
        %v359 = vpack.c.b16 %v331, %v329
        %v360 = vpack.c.b16 %v334, %v332
        %v361 = vpack.c.b16 %v335, %v333
        %v362 = vpack.c.b16 %v338, %v336
        %v363 = vpack.c.b16 %v339, %v337
        %v364 = vpack.c.b16 %v342, %v340
        %v365 = vpack.c.b16 %v343, %v341
        %v366 = vpack.c.b16 %v346, %v344
        %v367 = vpack.c.b16 %v347, %v345
        %v368 = vpack.c.b16 %v350, %v348
        %v369 = vpack.c.b16 %v351, %v349
        %v370 = vpack.c.b16 %v354, %v352
        %v371 = vpack.c.b16 %v355, %v353
        %388 = vmatpush.bf16.msra.mxu0 %v370
        %389 = vmatpush.bf16.msra.mxu0 %v368
        %390 = vmatpush.bf16.msra.mxu0 %v366
        %391 = vmatpush.bf16.msra.mxu0 %v364
        %392 = vmatpush.bf16.msra.mxu0 %v362
        %393 = vmatpush.bf16.msra.mxu0 %v360
        %394 = vmatpush.bf16.msra.mxu0 %v358
        %395 = vmatpush.bf16.msra.mxu0 %v356
        %396 = vmatmul.bf16.gmra.mxu0 %v306
        %v397 = vpop.f32.mrf.mxu0
        %v398 = vadd.f32 0.0, %v397
        %v399 = vpop.f32.mrf.mxu0
        %v400 = vadd.f32 0.0, %v399
        %401 = vdwg.mxu0
        %402 = vmatpush.bf16.msra.mxu0 %v371
        %403 = vmatpush.bf16.msra.mxu0 %v369
        %404 = vmatpush.bf16.msra.mxu0 %v367
        %405 = vmatpush.bf16.msra.mxu0 %v365
        %406 = vmatpush.bf16.msra.mxu0 %v363
        %407 = vmatpush.bf16.msra.mxu0 %v361
        %408 = vmatpush.bf16.msra.mxu0 %v359
        %409 = vmatpush.bf16.msra.mxu0 %v357
        %410 = vmatmul.bf16.gmra.mxu0 %v306
        %v411 = vpop.f32.mrf.mxu0
        %v412 = vadd.f32 0.0, %v411
        %v413 = vpop.f32.mrf.mxu0
        %v414 = vadd.f32 0.0, %v413
        %415 = vdwg.mxu0
        %v416 = vmax.f32 %v398, 0.0
        %v417 = vmax.f32 %v412, 0.0
        %v418 = vmax.f32 %v400, 0.0
        %v419 = vmax.f32 %v414, 0.0
        %420 = vst [vmem:[#allocation2] sm:$0xff] %v416
        %421 = vst [vmem:[#allocation2 + $0x8] sm:$0xff] %v417
        %422 = vst [vmem:[#allocation2 + $0x10] sm:$0xff] %v418
        %423 = vst [vmem:[#allocation2 + $0x18] sm:$0xff] %v419
        %v424 = vld [vmem:[#allocation2] sm:$0xff]
        %v425 = vld [vmem:[#allocation2 + $0x8] sm:$0xff]
        %v426 = vld [vmem:[#allocation2 + $0x10] sm:$0xff]
        %v427 = vld [vmem:[#allocation2 + $0x18] sm:$0xff]
        %v428 = vpack.c.bf16 %v426, %v424
        %v429 = vpack.c.bf16 %v427, %v425
        %v430 = vld [vmem:[%s235] sm:$0xf]
        %v431 = vld [vmem:[%s235 + $0x4] sm:$0xf]
        %v432 = vld [vmem:[%s235 + $0x8] sm:$0xf]
        %v433 = vld [vmem:[%s235 + $0xc] sm:$0xf]
        %v434 = vld [vmem:[%s235 + $0x10] sm:$0xf]
        %v435 = vld [vmem:[%s235 + $0x14] sm:$0xf]
        %v436 = vld [vmem:[%s235 + $0x18] sm:$0xf]
        %v437 = vld [vmem:[%s235 + $0x1c] sm:$0xf]
        %v438 = vld [vmem:[%s235 + $0x20] sm:$0xf]
        %v439 = vld [vmem:[%s235 + $0x24] sm:$0xf]
        %v440 = vld [vmem:[%s235 + $0x28] sm:$0xf]
        %v441 = vld [vmem:[%s235 + $0x2c] sm:$0xf]
        %v442 = vld [vmem:[%s235 + $0x30] sm:$0xf]
        %v443 = vld [vmem:[%s235 + $0x34] sm:$0xf]
        %v444 = vld [vmem:[%s235 + $0x38] sm:$0xf]
        %v445 = vld [vmem:[%s235 + $0x3c] sm:$0xf]
        %v446 = vld [vmem:[%s235 + $0x40] sm:$0xf]
        %v447 = vld [vmem:[%s235 + $0x44] sm:$0xf]
        %v448 = vld [vmem:[%s235 + $0x48] sm:$0xf]
        %v449 = vld [vmem:[%s235 + $0x4c] sm:$0xf]
        %v450 = vld [vmem:[%s235 + $0x50] sm:$0xf]
        %v451 = vld [vmem:[%s235 + $0x54] sm:$0xf]
        %v452 = vld [vmem:[%s235 + $0x58] sm:$0xf]
        %v453 = vld [vmem:[%s235 + $0x5c] sm:$0xf]
        %v454 = vld [vmem:[%s235 + $0x60] sm:$0xf]
        %v455 = vld [vmem:[%s235 + $0x64] sm:$0xf]
        %v456 = vld [vmem:[%s235 + $0x68] sm:$0xf]
        %v457 = vld [vmem:[%s235 + $0x6c] sm:$0xf]
        %v458 = vld [vmem:[%s235 + $0x70] sm:$0xf]
        %v459 = vld [vmem:[%s235 + $0x74] sm:$0xf]
        %v460 = vld [vmem:[%s235 + $0x78] sm:$0xf]
        %v461 = vld [vmem:[%s235 + $0x7c] sm:$0xf]
        %v494 = vunpack.c.l.b16 %v430
        %v495 = vunpack.c.l.b16 %v431
        %v496 = vunpack.c.l.b16 %v432
        %v497 = vunpack.c.l.b16 %v433
        %v498 = vunpack.c.l.b16 %v434
        %v499 = vunpack.c.l.b16 %v435
        %v500 = vunpack.c.l.b16 %v436
        %v501 = vunpack.c.l.b16 %v437
        %v502 = vunpack.c.l.b16 %v438
        %v503 = vunpack.c.l.b16 %v439
        %v504 = vunpack.c.l.b16 %v440
        %v505 = vunpack.c.l.b16 %v441
        %v506 = vunpack.c.l.b16 %v442
        %v507 = vunpack.c.l.b16 %v443
        %v508 = vunpack.c.l.b16 %v444
        %v509 = vunpack.c.l.b16 %v445
        %v510 = vunpack.c.l.b16 %v446
        %v511 = vunpack.c.l.b16 %v447
        %v512 = vunpack.c.l.b16 %v448
        %v513 = vunpack.c.l.b16 %v449
        %v514 = vunpack.c.l.b16 %v450
        %v515 = vunpack.c.l.b16 %v451
        %v516 = vunpack.c.l.b16 %v452
        %v517 = vunpack.c.l.b16 %v453
        %v518 = vunpack.c.l.b16 %v454
        %v519 = vunpack.c.l.b16 %v455
        %v520 = vunpack.c.l.b16 %v456
        %v521 = vunpack.c.l.b16 %v457
        %v522 = vunpack.c.l.b16 %v458
        %v523 = vunpack.c.l.b16 %v459
        %v524 = vunpack.c.l.b16 %v460
        %v525 = vunpack.c.l.b16 %v461
        %v526 = vpack.c.b16 %v495, %v494
        %v527 = vpack.c.b16 %v497, %v496
        %v528 = vpack.c.b16 %v499, %v498
        %v529 = vpack.c.b16 %v501, %v500
        %v530 = vpack.c.b16 %v503, %v502
        %v531 = vpack.c.b16 %v505, %v504
        %v532 = vpack.c.b16 %v507, %v506
        %v533 = vpack.c.b16 %v509, %v508
        %v534 = vpack.c.b16 %v511, %v510
        %v535 = vpack.c.b16 %v513, %v512
        %v536 = vpack.c.b16 %v515, %v514
        %v537 = vpack.c.b16 %v517, %v516
        %v538 = vpack.c.b16 %v519, %v518
        %v539 = vpack.c.b16 %v521, %v520
        %v540 = vpack.c.b16 %v523, %v522
        %v541 = vpack.c.b16 %v525, %v524
        %558 = vmatpush.bf16.msra.mxu0 %v533
        %559 = vmatpush.bf16.msra.mxu0 %v532
        %560 = vmatpush.bf16.msra.mxu0 %v531
        %561 = vmatpush.bf16.msra.mxu0 %v530
        %562 = vmatpush.bf16.msra.mxu0 %v529
        %563 = vmatpush.bf16.msra.mxu0 %v528
        %564 = vmatpush.bf16.msra.mxu0 %v527
        %565 = vmatpush.bf16.msra.mxu0 %v526
        %566 = vmatmul.bf16.gmra.mxu0 %v428
        %v567 = vpop.f32.mrf.mxu0
        %v568 = vadd.f32 0.0, %v567
        %v569 = vpop.f32.mrf.mxu0
        %v570 = vadd.f32 0.0, %v569
        %571 = vdwg.mxu0
        %572 = vmatpush.bf16.msra.mxu0 %v541
        %573 = vmatpush.bf16.msra.mxu0 %v540
        %574 = vmatpush.bf16.msra.mxu0 %v539
        %575 = vmatpush.bf16.msra.mxu0 %v538
        %576 = vmatpush.bf16.msra.mxu0 %v537
        %577 = vmatpush.bf16.msra.mxu0 %v536
        %578 = vmatpush.bf16.msra.mxu0 %v535
        %579 = vmatpush.bf16.msra.mxu0 %v534
        %580 = vmatmul.bf16.gmra.mxu0 %v429
        %v581 = vpop.f32.mrf.mxu0
        %v582 = vadd.f32 %v568, %v581
        %v583 = vpop.f32.mrf.mxu0
        %v584 = vadd.f32 %v570, %v583
        %585 = vdwg.mxu0
        %586 = vst [vmem:[%s272] sm:$0xff] %v582
        %587 = vst [vmem:[%s272 + $0x8] sm:$0xff] %v584
        %s588 = sand.u32 %s125, 1
        %s589 = scalar_lea.sflag [#allocation5], %s588
        %s590 = sand.u32 %s125, 1
        %s591 = smul.addr %s590, 16
        %s592 = scalar_lea.vmem [#allocation8], %s591
        // Predicated region
        $region41: #{_lambda_.1} parent=31 // pred_check
          %p593 = pneg %p135
        $region42: #{_lambda_.1} parent=31 // pred_check_branch
          %595 = sbr.rel (%p593) target = $region44
        $region43: #{_lambda_.1} parent=31 // pred_region
          %s596 = smul.u32 2, %s28
          %598 = vsyncadd %s589, 0
          %s599 = smul.addr %s27, 2
          %s600 = sadd.s32 %s596, %s599
          %s601 = smul.addr %s600, 8
          %s602 = scalar_lea.hbm %s3, %s601
          %s603 = sshll.u32 %s592, 4
          %s604 = int_to_ptr.vmem [resolvable:$true] %s603
          %s605 = sshll.u32 %s602, 4
          %s606 = int_to_ptr.hbm [resolvable:$true] %s605
          %611 = dma.vmem_to_hbm [thread:$0]  %s604, 256, %s606, %s589, 128, 128, 8
        $region44: #{_lambda_.1} parent=31 // pred_fallthru
          _
      $region32: #{_lambda_.1} parent=5 // pred_fallthru
        _
      %p612 = scmp.le.s32.totalorder 2, %s18
      // Predicated region
      $region45: #{_lambda_.1} parent=5 // pred_check
        %p613 = pneg %p612
      $region46: #{_lambda_.1} parent=5 // pred_check_branch
        %615 = sbr.rel (%p613) target = $region48
      $region47: #{_lambda_.1} parent=5 // pred_region
        %s616 = ssub.s32 %s18, 2
        // Predicated region
        $region49: #{_lambda_.1} parent=47 // pred_check
          %p617 = pneg %p141
        $region50: #{_lambda_.1} parent=47 // pred_check_branch
          %619 = sbr.rel (%p617) target = $region52
        $region51: #{_lambda_.1} parent=47 // pred_region
          %s620 = sand.u32 %s126, 1
          %s621 = scalar_lea.sflag [#allocation5], %s620
          %s622 = sand.u32 %s126, 1
          %s623 = smul.addr %s622, 16
          %s624 = scalar_lea.vmem [#allocation8], %s623
          %626 = dma.done %s621, 256
        $region52: #{_lambda_.1} parent=47 // pred_fallthru
          _
      $region48: #{_lambda_.1} parent=5 // pred_fallthru
        _
    $region6: #{_lambda_.1} parent=1 // loop_footer
      %s22 = sadd.s32 1, %s18
    $region7: #{_lambda_.1} parent=1 // loop_footer_branch
      %17 = sbr.rel target = $region3
    $region8: #{_lambda_.1} parent=1 // loop_exit
      _
    %627 = vsyncpa [#allocation4], 1
    %s628 = scalar_lea.sflag [#allocation4], 1
    %629 = vsyncpa %s628, 1
    %630 = vsyncpa [#allocation7], 1
    %s631 = scalar_lea.sflag [#allocation7], 1
    %632 = vsyncpa %s631, 1
    %633 = vsyncpa [#allocation5], 1
    %s634 = scalar_lea.sflag [#allocation5], 1
    %635 = vsyncpa %s634, 1

</llo_original>
